<compile_context>
chip_gen: v7x
topology: tpu7x:2x2x1
jax: 0.10.0
libtpu: 0.0.40
codegen_flags: <defaults>
</compile_context>

<pallas_src>
import jax
import jax.numpy as jnp
from jax.experimental import pallas as pl
from jax.experimental.pallas import tpu as pltpu  # noqa: F401  (TPU backend)

batch_size_int = 3
hidden_size_int = 4
input_size_int = 4


def _rnn_cell_kernel(x_ref, h_ref, w_ref, out_ref):
    # x_ref:   (B, In)        VMEM
    # h_ref:   (B, H)         VMEM   (HBM buffer aliased with out_ref)
    # w_ref:   (In+H+1, H)    VMEM   (= [W_ih^T ; W_hh^T ; b_ih+b_hh])
    # out_ref: (B, H)         VMEM
    x = x_ref[...]
    h = h_ref[...]                      # read fully before any write (aliasing-safe)
    in_size = x.shape[1]
    hid_size = h.shape[1]

    # Two MXU dots on static ref slices + broadcasted bias row.
    pre = (
        jnp.dot(x, w_ref[:in_size, :], preferred_element_type=jnp.float32)
        + jnp.dot(h, w_ref[in_size:in_size + hid_size, :],
                  preferred_element_type=jnp.float32)
        + w_ref[in_size + hid_size:in_size + hid_size + 1, :]
    )
    out_ref[...] = jnp.tanh(pre).astype(out_ref.dtype)


def rnn_cell_forward(x, hidden, w_cat_b):
    """One nn.RNNCell(tanh) step, computed inside a single Pallas TPU kernel."""
    B, In = x.shape
    H = hidden.shape[1]

    # Tiny arrays: each BlockSpec covers the full array, single grid point.
    full = lambda shape: pl.BlockSpec(shape, lambda: tuple(0 for _ in shape))
    return pl.pallas_call(
        _rnn_cell_kernel,
        out_shape=jax.ShapeDtypeStruct((B, H), hidden.dtype),
        grid=(),
        in_specs=[
            full((B, In)),           # x
            full((B, H)),            # hidden (aliased to the output)
            full((In + H + 1, H)),   # stacked transposed weights + bias row
        ],
        out_specs=full((B, H)),
        input_output_aliases={1: 0},   # old hidden buffer -> new hidden
    )(x, hidden, w_cat_b)


class RecursiveNet:
    """JAX/Pallas port of `recursive_net` (a single RNNCell step)."""

    def __init__(self, batch_size, input_size, hidden_size, key):
        self.batch_size_int = batch_size
        self.input_size_int = input_size
        self.hidden_size_int = hidden_size
        k1, k2, k3, k4 = jax.random.split(key, 4)
        # Deterministic init, matching PyTorch's U(-1/sqrt(H), 1/sqrt(H)) scheme.
        bound = 1.0 / (hidden_size ** 0.5)
        self.w_ih = jax.random.uniform(k1, (hidden_size, input_size),
                                       jnp.float32, -bound, bound)
        self.w_hh = jax.random.uniform(k2, (hidden_size, hidden_size),
                                       jnp.float32, -bound, bound)
        self.b_ih = jax.random.uniform(k3, (hidden_size,),
                                       jnp.float32, -bound, bound)
        self.b_hh = jax.random.uniform(k4, (hidden_size,),
                                       jnp.float32, -bound, bound)
        # Hoisted parameter prep (done once, not per forward step):
        #   W_cat_b = [W_ih^T ; W_hh^T ; b_ih + b_hh]  -> (In + H + 1, H)
        self.w_cat_b = jnp.concatenate(
            [jnp.transpose(self.w_ih),
             jnp.transpose(self.w_hh),
             (self.b_ih + self.b_hh).reshape(1, hidden_size)],
            axis=0)
        # Compile the step once; donate the hidden buffer so the in-kernel
        # input_output_alias (old hidden -> new hidden) takes effect.
        self._step = jax.jit(rnn_cell_forward, donate_argnums=(1,))

    def init_hidden(self):
        return jnp.zeros((self.batch_size_int, self.hidden_size_int), jnp.float32)

    def __call__(self, x, hidden):
        return self._step(x, hidden, self.w_cat_b)


if __name__ == "__main__":
    key = jax.random.PRNGKey(0)
    k_params, k_x = jax.random.split(key, 2)

    net = RecursiveNet(batch_size_int, input_size_int, hidden_size_int, k_params)

    x = jax.random.normal(k_x, (batch_size_int, input_size_int), jnp.float32)
    hidden = net.init_hidden()

    # Pure-JAX reference of the RNNCell math, computed BEFORE the kernel call
    # (the kernel donates/aliases the hidden buffer to its output).
    ref = jnp.tanh(x @ net.w_ih.T + net.b_ih + hidden @ net.w_hh.T + net.b_hh)
    ref = jax.block_until_ready(ref)

    out = net(x, hidden)
    out = jax.block_until_ready(out)

    assert out.shape == (batch_size_int, hidden_size_int)
    assert bool(jnp.allclose(out, ref, atol=1e-5, rtol=1e-5))

    print("KERNEL_OK")
</pallas_src>

<mosaic_0001>
module attributes {stable_mosaic.version = 11 : i64} {
  func.func @_rnn_cell_kernel(%arg0: memref<3x4xf32, #tpu.memory_space<vmem>>, %arg1: memref<3x4xf32, #tpu.memory_space<vmem>>, %arg2: memref<9x4xf32, #tpu.memory_space<vmem>>, %arg3: memref<3x4xf32, #tpu.memory_space<vmem>>) attributes {dimension_semantics = [], scalar_prefetch = 0 : i64, scratch_operands = 0 : i64, tpu.core_type = #tpu.core_type<tc>} {
    %c0 = arith.constant 0 : index
    %c0_0 = arith.constant 0 : index
    %0 = vector.load %arg0[%c0, %c0_0] : memref<3x4xf32, #tpu.memory_space<vmem>>, vector<3x4xf32>
    %c0_1 = arith.constant 0 : index
    %c0_2 = arith.constant 0 : index
    %1 = vector.load %arg1[%c0_1, %c0_2] : memref<3x4xf32, #tpu.memory_space<vmem>>, vector<3x4xf32>
    %c0_3 = arith.constant 0 : index
    %c0_4 = arith.constant 0 : index
    %2 = vector.load %arg2[%c0_3, %c0_4] : memref<9x4xf32, #tpu.memory_space<vmem>>, vector<4x4xf32>
    %cst = arith.constant dense<0.000000e+00> : vector<3x4xf32>
    %3 = tpu.matmul %0, %2, %cst {dimension_numbers = #tpu.dot_dimension_numbers<[1], [0], [0], [1], [0, 0, 1, 1], [], []>} : vector<3x4xf32>, vector<4x4xf32>, vector<3x4xf32> -> vector<3x4xf32>
    %c4 = arith.constant 4 : index
    %c0_5 = arith.constant 0 : index
    %4 = vector.load %arg2[%c4, %c0_5] : memref<9x4xf32, #tpu.memory_space<vmem>>, vector<4x4xf32>
    %cst_6 = arith.constant dense<0.000000e+00> : vector<3x4xf32>
    %5 = tpu.matmul %1, %4, %cst_6 {dimension_numbers = #tpu.dot_dimension_numbers<[1], [0], [0], [1], [0, 0, 1, 1], [], []>} : vector<3x4xf32>, vector<4x4xf32>, vector<3x4xf32> -> vector<3x4xf32>
    %6 = arith.addf %3, %5 : vector<3x4xf32>
    %c8 = arith.constant 8 : index
    %c0_7 = arith.constant 0 : index
    %7 = vector.load %arg2[%c8, %c0_7] : memref<9x4xf32, #tpu.memory_space<vmem>>, vector<1x4xf32>
    %8 = vector.broadcast %7 : vector<1x4xf32> to vector<3x4xf32>
    %9 = arith.addf %6, %8 : vector<3x4xf32>
    %10 = math.tanh %9 : vector<3x4xf32>
    %c0_8 = arith.constant 0 : index
    %c0_9 = arith.constant 0 : index
    %11 = vector.load %arg3[%c0_8, %c0_9] : memref<3x4xf32, #tpu.memory_space<vmem>>, vector<3x4xf32>
    tpu.vector_store %arg3[%c0_8, %c0_9], %10 {strides = array<i32>} : memref<3x4xf32, #tpu.memory_space<vmem>>, vector<3x4xf32>,
    return
  }
}

</mosaic_0001>

<llo_original>
// kernel: rnn_cell_forward.1
$region0: #{rnn_cell_forward.1}
  #allocation0 [shape = 'u32[]', space=smem, size = 0x4, offset = 0x4, fixed_abs, tag = 'smem constant byte address 0x4 - core index']
  #allocation1 [shape = 'u32[144,128]{1,0:T(1,128)}', space=vmem, size = 0x12000, scoped, tag = 'internal scratch']
  %s0 = inlined_call_operand.vmem [shape: f32[3,4], index: 0, kind: input, shape index: {}]
  %s1 = inlined_call_operand.hbm [shape: f32[3,4], index: 1, kind: input, shape index: {}, may-alias: {1,3}]
  %s2 = inlined_call_operand.vmem [shape: f32[9,4], index: 2, kind: input, shape index: {}]
  %s3 = inlined_call_operand.hbm [shape: f32[3,4], index: 3, kind: output, shape index: {}, may-alias: {1,3}]
  %s4 = sld [smem:[#allocation0]]
  $region26: #{rnn_cell_forward.1} parent=0
    _
  %s6 = ssub.s32 1, %s4
  %s7 = scalar_select 0, %s6, %s4
  $region1: #{rnn_cell_forward.1} parent=0
    #allocation2 [shape = 'u8[2048]{0}', space=vmem, size = 0x800, scoped, tag = 'input window, operand 1, single buffered']
    #allocation3 [shape = 's32[1]{0}', space=sflag, size = 0x4, scoped, tag = 'scoped memory for rnn_cell_forward.1']
    #allocation4 [shape = 's32[1]{0}', space=sflag, size = 0x4, scoped, tag = 'scoped memory for rnn_cell_forward.1']
    #allocation5 [shape = 'u8[2048]{0}', space=vmem, size = 0x800, scoped, tag = 'output window, operand 0, single buffered']
    %8 = vsyncpa [#allocation3], 0
    %9 = vsyncpa [#allocation4], 0
    // Predicated region
    $region2: #{rnn_cell_forward.1} parent=1 // pred_check
      _
    $region3: #{rnn_cell_forward.1} parent=1 // pred_check_branch
      %11 = sbr.rel (0) target = $region5
    $region4: #{rnn_cell_forward.1} parent=1 // pred_region
      _
    $region5: #{rnn_cell_forward.1} parent=1 // pred_fallthru
      _
    // Predicated region
    $region6: #{rnn_cell_forward.1} parent=1 // pred_check
      _
    $region7: #{rnn_cell_forward.1} parent=1 // pred_check_branch
      %13 = sbr.rel (0) target = $region9
    $region8: #{rnn_cell_forward.1} parent=1 // pred_region
      %s15 = ssub.s32 64, 64
      %16 = vsyncadd [#allocation3], %s15
      %s18 = sshll.u32 [#allocation2], 4
      %s19 = int_to_ptr.vmem [resolvable:$true] %s18
      %21 = dma.hbm_to_vmem [thread:$0]  %s1, 64, %s19, [#allocation3]
    $region9: #{rnn_cell_forward.1} parent=1 // pred_fallthru
      _
    // Predicated region
    $region10: #{rnn_cell_forward.1} parent=1 // pred_check
      _
    $region11: #{rnn_cell_forward.1} parent=1 // pred_check_branch
      %23 = sbr.rel (0) target = $region13
    $region12: #{rnn_cell_forward.1} parent=1 // pred_region
      _
    $region13: #{rnn_cell_forward.1} parent=1 // pred_fallthru
      _
    // Predicated region
    $region14: #{rnn_cell_forward.1} parent=1 // pred_check
      _
    $region15: #{rnn_cell_forward.1} parent=1 // pred_check_branch
      %25 = sbr.rel (0) target = $region17
    $region16: #{rnn_cell_forward.1} parent=1 // pred_region
      %26 = dma.done [#allocation3], 64
    $region17: #{rnn_cell_forward.1} parent=1 // pred_fallthru
      _
    %v27 = vld [vmem:[%s0] sm:$0x7]
    %v28 = vld [vmem:[#allocation2] sm:$0x7]
    %v29 = vld [vmem:[%s2] sm:$0xf]
    %v30 = vld [vmem:[%s2 + $0x4] sm:$0xf]
    %vm31 = vcmask 31744
    %v33 = vsel %vm31, %v28, 0
    %vm35 = vcmask 1043456
    %v37 = vsel %vm35, %v30, 0
    %39 = vmatprep.subr.mxu0 0.0
    %40 = vmatpush1.msra.mxu0 %v37
    %41 = vmatprep.subr.mxu0 0.0
    %42 = vmatpush1.msra.mxu0 0.0
    %43 = vmatprep.subr.mxu0 0.0
    %44 = vmatpush1.msra.mxu0 0.0
    %45 = vmatprep.subr.mxu0 0.0
    %46 = vmatpush1.msra.mxu0 0.0
    %47 = vmatprep.subr.mxu0 0.0
    %48 = vmatpush1.msra.mxu0 0.0
    %49 = vmatprep.subr.mxu0 0.0
    %50 = vmatpush1.msra.mxu0 0.0
    %51 = vmatprep.subr.mxu0 0.0
    %52 = vmatpush1.msra.mxu0 0.0
    %53 = vmatprep.subr.mxu0 0.0
    %54 = vmatpush1.msra.mxu0 0.0
    %55 = vmatprep.subr.mxu0 0.0
    %56 = vmatpush1.msra.mxu0 0.0
    %57 = vmatprep.subr.mxu0 0.0
    %58 = vmatpush1.msra.mxu0 0.0
    %59 = vmatprep.subr.mxu0 0.0
    %60 = vmatpush1.msra.mxu0 0.0
    %61 = vmatprep.subr.mxu0 0.0
    %62 = vmatpush1.msra.mxu0 0.0
    %63 = vmatprep.subr.mxu0 0.0
    %64 = vmatpush1.msra.mxu0 0.0
    %65 = vmatprep.subr.mxu0 0.0
    %66 = vmatpush1.msra.mxu0 0.0
    %67 = vmatprep.subr.mxu0 0.0
    %68 = vmatpush1.msra.mxu0 0.0
    %69 = vmatprep.subr.mxu0 0.0
    %70 = vmatpush1.msra.mxu0 0.0
    %71 = vmatprep.subr.mxu0 0.0
    %72 = vmatpush1.msra.mxu0 0.0
    %73 = vmatprep.subr.mxu0 0.0
    %74 = vmatpush1.msra.mxu0 0.0
    %75 = vmatprep.subr.mxu0 0.0
    %76 = vmatpush1.msra.mxu0 0.0
    %77 = vmatprep.subr.mxu0 0.0
    %78 = vmatpush1.msra.mxu0 0.0
    %79 = vmatprep.subr.mxu0 0.0
    %80 = vmatpush1.msra.mxu0 0.0
    %81 = vmatprep.subr.mxu0 0.0
    %82 = vmatpush1.msra.mxu0 0.0
    %83 = vmatprep.subr.mxu0 0.0
    %84 = vmatpush1.msra.mxu0 0.0
    %85 = vmatprep.subr.mxu0 0.0
    %86 = vmatpush1.msra.mxu0 0.0
    %87 = vmatprep.subr.mxu0 0.0
    %88 = vmatpush1.msra.mxu0 0.0
    %89 = vmatprep.subr.mxu0 0.0
    %90 = vmatpush1.msra.mxu0 0.0
    %91 = vmatprep.subr.mxu0 0.0
    %92 = vmatpush1.msra.mxu0 0.0
    %93 = vmatprep.subr.mxu0 0.0
    %94 = vmatpush1.msra.mxu0 0.0
    %95 = vmatprep.subr.mxu0 0.0
    %96 = vmatpush1.msra.mxu0 0.0
    %97 = vmatprep.subr.mxu0 0.0
    %98 = vmatpush1.msra.mxu0 0.0
    %99 = vmatprep.subr.mxu0 0.0
    %100 = vmatpush1.msra.mxu0 0.0
    %101 = vmatprep.subr.mxu0 0.0
    %102 = vmatpush1.msra.mxu0 0.0
    %103 = vmatprep.mubr.f32.mxu0 0.0
    %104 = vmatmul.mubr.f32.gmra.mrb[0].mxu0 %v33
    %v105 = vpop.f32.mrb[0].mxu0
    %v106 = vadd.f32 0.0, %v105
    %v107 = vpop.f32.mrb[0].mxu0
    %108 = vdwg.mxu0
    %v110 = vsel %vm31, %v27, 0
    %v113 = vsel %vm35, %v29, 0
    %115 = vmatprep.subr.mxu0 0.0
    %116 = vmatpush1.msra.mxu0 %v113
    %117 = vmatprep.subr.mxu0 0.0
    %118 = vmatpush1.msra.mxu0 0.0
    %119 = vmatprep.subr.mxu0 0.0
    %120 = vmatpush1.msra.mxu0 0.0
    %121 = vmatprep.subr.mxu0 0.0
    %122 = vmatpush1.msra.mxu0 0.0
    %123 = vmatprep.subr.mxu0 0.0
    %124 = vmatpush1.msra.mxu0 0.0
    %125 = vmatprep.subr.mxu0 0.0
    %126 = vmatpush1.msra.mxu0 0.0
    %127 = vmatprep.subr.mxu0 0.0
    %128 = vmatpush1.msra.mxu0 0.0
    %129 = vmatprep.subr.mxu0 0.0
    %130 = vmatpush1.msra.mxu0 0.0
    %131 = vmatprep.subr.mxu0 0.0
    %132 = vmatpush1.msra.mxu0 0.0
    %133 = vmatprep.subr.mxu0 0.0
    %134 = vmatpush1.msra.mxu0 0.0
    %135 = vmatprep.subr.mxu0 0.0
    %136 = vmatpush1.msra.mxu0 0.0
    %137 = vmatprep.subr.mxu0 0.0
    %138 = vmatpush1.msra.mxu0 0.0
    %139 = vmatprep.subr.mxu0 0.0
    %140 = vmatpush1.msra.mxu0 0.0
    %141 = vmatprep.subr.mxu0 0.0
    %142 = vmatpush1.msra.mxu0 0.0
    %143 = vmatprep.subr.mxu0 0.0
    %144 = vmatpush1.msra.mxu0 0.0
    %145 = vmatprep.subr.mxu0 0.0
    %146 = vmatpush1.msra.mxu0 0.0
    %147 = vmatprep.subr.mxu0 0.0
    %148 = vmatpush1.msra.mxu0 0.0
    %149 = vmatprep.subr.mxu0 0.0
    %150 = vmatpush1.msra.mxu0 0.0
    %151 = vmatprep.subr.mxu0 0.0
    %152 = vmatpush1.msra.mxu0 0.0
    %153 = vmatprep.subr.mxu0 0.0
    %154 = vmatpush1.msra.mxu0 0.0
    %155 = vmatprep.subr.mxu0 0.0
    %156 = vmatpush1.msra.mxu0 0.0
    %157 = vmatprep.subr.mxu0 0.0
    %158 = vmatpush1.msra.mxu0 0.0
    %159 = vmatprep.subr.mxu0 0.0
    %160 = vmatpush1.msra.mxu0 0.0
    %161 = vmatprep.subr.mxu0 0.0
    %162 = vmatpush1.msra.mxu0 0.0
    %163 = vmatprep.subr.mxu0 0.0
    %164 = vmatpush1.msra.mxu0 0.0
    %165 = vmatprep.subr.mxu0 0.0
    %166 = vmatpush1.msra.mxu0 0.0
    %167 = vmatprep.subr.mxu0 0.0
    %168 = vmatpush1.msra.mxu0 0.0
    %169 = vmatprep.subr.mxu0 0.0
    %170 = vmatpush1.msra.mxu0 0.0
    %171 = vmatprep.subr.mxu0 0.0
    %172 = vmatpush1.msra.mxu0 0.0
    %173 = vmatprep.subr.mxu0 0.0
    %174 = vmatpush1.msra.mxu0 0.0
    %175 = vmatprep.subr.mxu0 0.0
    %176 = vmatpush1.msra.mxu0 0.0
    %177 = vmatprep.subr.mxu0 0.0
    %178 = vmatpush1.msra.mxu0 0.0
    %179 = vmatprep.mubr.f32.mxu0 0.0
    %180 = vmatmul.mubr.f32.gmra.mrb[0].mxu0 %v110
    %v181 = vpop.f32.mrb[0].mxu0
    %v182 = vadd.f32 %v106, %v181
    %v183 = vpop.f32.mrb[0].mxu0
    %184 = vdwg.mxu0
    %v185 = vld [vmem:[%s2 + $0x8] sm:$0x1]
    %v186 = vlaneseq
    %v187 = vshrl.u32 %v186, 7
    %v188 = vsub.s32 0, %v187
    %v189 = vrot.slane %v185, %v188
    %v190 = vadd.f32 %v182, %v189
    %v191 = vtanh.pop %v190
    %vm192 = vcmask 26624
    %193 = vst.msk [vmem:[#allocation5] sm:$0x7] %vm192, %v191
    // Predicated region
    $region18: #{rnn_cell_forward.1} parent=1 // pred_check
      _
    $region19: #{rnn_cell_forward.1} parent=1 // pred_check_branch
      %195 = sbr.rel (0) target = $region21
    $region20: #{rnn_cell_forward.1} parent=1 // pred_region
      %s197 = ssub.s32 64, 64
      %198 = vsyncadd [#allocation4], %s197
      %s200 = sshll.u32 [#allocation5], 4
      %s201 = int_to_ptr.vmem [resolvable:$true] %s200
      %203 = dma.vmem_to_hbm [thread:$0]  %s201, 64, %s3, [#allocation4]
    $region21: #{rnn_cell_forward.1} parent=1 // pred_fallthru
      _
    // Predicated region
    $region22: #{rnn_cell_forward.1} parent=1 // pred_check
      _
    $region23: #{rnn_cell_forward.1} parent=1 // pred_check_branch
      %205 = sbr.rel (0) target = $region25
    $region24: #{rnn_cell_forward.1} parent=1 // pred_region
      %206 = dma.done [#allocation4], 64
    $region25: #{rnn_cell_forward.1} parent=1 // pred_fallthru
      _
    %207 = vsyncpa [#allocation3], 1
    %208 = vsyncpa [#allocation4], 1

</llo_original>
